<compile_context>
chip_gen: v7x
topology: tpu7x:2x2x1
jax: 0.10.0
libtpu: 0.0.40
codegen_flags: <defaults>
</compile_context>

<pallas_src>
import jax
import jax.numpy as jnp
from jax import lax
from jax.experimental import pallas as pl
from jax.experimental.pallas import tpu as pltpu

LANES = 128
SUBLANES = 8
_SMALL_THRESHOLD = 64 * 1024  # below this, XLA fusion beats kernel dispatch


def _round_up(x, mult):
    return ((x + mult - 1) // mult) * mult


def _pick_block_rows():
    """Rows-per-tile, sized so 2 inputs x 2 buffers x tile fits scoped VMEM."""
    try:
        kind = jax.devices()[0].device_kind.lower()
    except Exception:  # pragma: no cover - defensive
        kind = ""
    if "v6" in kind:
        return 8192   # 4 MiB/tile f32 -> ~16 MiB resident, under 32 MiB scoped
    if "v7" in kind:
        return 4096   # 64 MiB VMEM/TC -> keep resident budget small
    return 2048       # v5e / default: ~4 MiB resident, under 16 MiB scoped


def custom_loss(output, target, *, block_rows=None,
                min_kernel_elems=_SMALL_THRESHOLD):
    """Pallas equivalent of CustomLoss.forward: mean((output - target)**2)."""
    assert output.shape == target.shape
    n = int(output.size)

    # Tiny inputs: the pallas_call launch is 100% overhead -> plain XLA fusion.
    if n < min_kernel_elems:
        diff = output.astype(jnp.float32) - target.astype(jnp.float32)
        return jnp.mean(diff * diff)

    out_flat = output.reshape(-1)
    tgt_flat = target.reshape(-1)

    # Pad only to the next lane multiple (128).  Zero pads on both operands
    # contribute exactly 0 to the sum; we divide by the true element count.
    n_lanes = _round_up(n, LANES)
    if n_lanes != n:
        out_flat = jnp.pad(out_flat, (0, n_lanes - n))
        tgt_flat = jnp.pad(tgt_flat, (0, n_lanes - n))
    m = n_lanes // LANES  # rows of 128 lanes

    if block_rows is None:
        block_rows = _pick_block_rows()
    # Sublane-tile aligned (16 covers bf16 packing), never larger than needed.
    block_rows = max(16, min(_round_up(block_rows, 16), _round_up(m, 16)))

    out2d = out_flat.reshape(m, LANES)   # reshape of contiguous flat: no copy
    tgt2d = tgt_flat.reshape(m, LANES)

    num_blocks = pl.cdiv(m, block_rows)
    needs_row_mask = (m % block_rows) != 0   # last block partially out of range
    inv_n = 1.0 / float(n)                   # hoisted: multiply once at the end

    def _mse_kernel(o_ref, t_ref, loss_ref, acc_ref):
        pid = pl.program_id(0)

        @pl.when(pid == 0)
        def _init():
            acc_ref[...] = jnp.zeros_like(acc_ref)

        # Upcast in-kernel (keeps HBM traffic at the input dtype width).
        diff = o_ref[...].astype(jnp.float32) - t_ref[...].astype(jnp.float32)
        sq = diff * diff
        if needs_row_mask:
            # Rows past m in the final (partial) block hold stale/undefined
            # data; select them to 0 before accumulating.
            row = lax.broadcasted_iota(jnp.int32, (block_rows, LANES), 0)
            sq = jnp.where(row + pid * block_rows < m, sq, 0.0)
        # (block_rows, 128) -> (8, 128) partial sums: pure VPU vreg adds.
        acc_ref[...] += sq.reshape(block_rows // SUBLANES, SUBLANES, LANES).sum(
            axis=0)

        @pl.when(pid == pl.num_programs(0) - 1)
        def _finalize():
            # Single cross-lane reduction + precomputed 1/n, only once.
            loss_ref[0, 0] = jnp.sum(acc_ref[...]) * jnp.float32(inv_n)

    loss = pl.pallas_call(
        _mse_kernel,
        out_shape=jax.ShapeDtypeStruct((1, 1), jnp.float32),
        grid_spec=pltpu.PrefetchScalarGridSpec(
            num_scalar_prefetch=0,
            grid=(num_blocks,),
            in_specs=[
                pl.BlockSpec((block_rows, LANES), lambda i: (i, 0)),
                pl.BlockSpec((block_rows, LANES), lambda i: (i, 0)),
            ],
            out_specs=pl.BlockSpec((1, 1), lambda i: (0, 0),
                                   memory_space=pltpu.MemorySpace.SMEM),
            scratch_shapes=[pltpu.VMEM((SUBLANES, LANES), jnp.float32)],
        ),
        compiler_params=pltpu.CompilerParams(
            dimension_semantics=("arbitrary",)),
    )(out2d, tgt2d)
    return loss[0, 0]


if __name__ == "__main__":
    key = jax.random.PRNGKey(0)
    k1, k2, k3, k4, k5, k6 = jax.random.split(key, 6)

    # 1) The module's stated shapes: (10, 1).  Small path (XLA fusion).
    output = jax.random.normal(k1, (10, 1), dtype=jnp.float32)
    target = jax.random.normal(k2, (10, 1), dtype=jnp.float32)
    loss_small = custom_loss(output, target)
    jax.block_until_ready(loss_small)
    ref_small = jnp.mean((output - target) ** 2)
    assert jnp.allclose(loss_small, ref_small, rtol=1e-6, atol=1e-6), (
        loss_small, ref_small)

    # 2) Pallas kernel path with lane padding + partial last block (row mask):
    #    10000 elems, block_rows=64 -> m=79 rows, grid=2, tail masked.
    big_out = jax.random.normal(k3, (10000, 1), dtype=jnp.float32)
    big_tgt = jax.random.normal(k4, (10000, 1), dtype=jnp.float32)
    loss_big = custom_loss(big_out, big_tgt, block_rows=64, min_kernel_elems=0)
    jax.block_until_ready(loss_big)
    ref_big = jnp.mean((big_out - big_tgt) ** 2)
    assert jnp.allclose(loss_big, ref_big, rtol=1e-5, atol=1e-6), (
        loss_big, ref_big)

    # 3) Pallas kernel path, 128-aligned bf16 input (no pad, no mask, grid=8):
    bf_out = jax.random.normal(k5, (64, 256), dtype=jnp.bfloat16)
    bf_tgt = jax.random.normal(k6, (64, 256), dtype=jnp.bfloat16)
    loss_bf = custom_loss(bf_out, bf_tgt, block_rows=16, min_kernel_elems=0)
    jax.block_until_ready(loss_bf)
    dbf = bf_out.astype(jnp.float32) - bf_tgt.astype(jnp.float32)
    ref_bf = jnp.mean(dbf * dbf)
    assert jnp.allclose(loss_bf, ref_bf, rtol=1e-5, atol=1e-6), (loss_bf, ref_bf)

    print("KERNEL_OK")
</pallas_src>

<mosaic_0001>
module attributes {stable_mosaic.version = 11 : i64} {
  func.func @_mse_kernel(%arg0: i32, %arg1: memref<64x128xf32, #tpu.memory_space<vmem>>, %arg2: memref<64x128xf32, #tpu.memory_space<vmem>>, %arg3: memref<1x1xf32, #tpu.memory_space<smem>>, %arg4: memref<8x128xf32, #tpu.memory_space<vmem>>) attributes {dimension_semantics = [#tpu.dimension_semantics<arbitrary>], iteration_bounds = array<i64: 2>, scalar_prefetch = 0 : i64, scratch_operands = 1 : i64, tpu.core_type = #tpu.core_type<tc>, window_params = [{transform_indices = @transform_0, window_bounds = array<i64: 64, 128>}, {transform_indices = @transform_1, window_bounds = array<i64: 64, 128>}, {transform_indices = @transform_2, window_bounds = array<i64: 1, 1>}]} {
    %c0_i32 = arith.constant 0 : i32
    %0 = arith.cmpi eq, %arg0, %c0_i32 : i32
    %1 = arith.extui %0 : i1 to i32
    %c0_i32_0 = arith.constant 0 : i32
    %2 = arith.cmpi ne, %1, %c0_i32_0 : i32
    scf.if %2 {
      %cst_10 = arith.constant 0.000000e+00 : f32
      %23 = vector.broadcast %cst_10 : f32 to vector<8x128xf32>
      %c0_11 = arith.constant 0 : index
      %c0_12 = arith.constant 0 : index
      %24 = vector.load %arg4[%c0_11, %c0_12] : memref<8x128xf32, #tpu.memory_space<vmem>>, vector<8x128xf32>
      tpu.vector_store %arg4[%c0_11, %c0_12], %23 {strides = array<i32>} : memref<8x128xf32, #tpu.memory_space<vmem>>, vector<8x128xf32>,
    } else {
    }
    %c0 = arith.constant 0 : index
    %c0_1 = arith.constant 0 : index
    %3 = vector.load %arg1[%c0, %c0_1] : memref<64x128xf32, #tpu.memory_space<vmem>>, vector<64x128xf32>
    %c0_2 = arith.constant 0 : index
    %c0_3 = arith.constant 0 : index
    %4 = vector.load %arg2[%c0_2, %c0_3] : memref<64x128xf32, #tpu.memory_space<vmem>>, vector<64x128xf32>
    %5 = arith.subf %3, %4 : vector<64x128xf32>
    %6 = arith.mulf %5, %5 : vector<64x128xf32>
    %7 = tpu.iota {dimensions = array<i32: 0>} : vector<64x128xi32>
    %c64_i32 = arith.constant 64 : i32
    %8 = arith.muli %arg0, %c64_i32 : i32
    %9 = vector.broadcast %8 : i32 to vector<64x128xi32>
    %10 = arith.addi %7, %9 : vector<64x128xi32>
    %c79_i32 = arith.constant 79 : i32
    %11 = vector.broadcast %c79_i32 : i32 to vector<64x128xi32>
    %12 = arith.cmpi slt, %10, %11 : vector<64x128xi32>
    %cst = arith.constant 0.000000e+00 : f32
    %13 = vector.broadcast %cst : f32 to vector<64x128xf32>
    %14 = arith.select %12, %6, %13 : vector<64x128xi1>, vector<64x128xf32>
    %c0_4 = arith.constant 0 : index
    %c0_5 = arith.constant 0 : index
    %15 = vector.load %arg4[%c0_4, %c0_5] : memref<8x128xf32, #tpu.memory_space<vmem>>, vector<8x128xf32>
    %16 = vector.shape_cast %14 : vector<64x128xf32> to vector<8x8x128xf32>
    %cst_6 = arith.constant dense<0.000000e+00> : vector<8x128xf32>
    %17 = vector.multi_reduction <add>, %16, %cst_6 [0] : vector<8x8x128xf32> to vector<8x128xf32>
    %18 = arith.addf %15, %17 : vector<8x128xf32>
    %c0_7 = arith.constant 0 : index
    %c0_8 = arith.constant 0 : index
    %19 = vector.load %arg4[%c0_7, %c0_8] : memref<8x128xf32, #tpu.memory_space<vmem>>, vector<8x128xf32>
    tpu.vector_store %arg4[%c0_7, %c0_8], %18 {strides = array<i32>} : memref<8x128xf32, #tpu.memory_space<vmem>>, vector<8x128xf32>,
    %c1_i32 = arith.constant 1 : i32
    %20 = arith.cmpi eq, %arg0, %c1_i32 : i32
    %21 = arith.extui %20 : i1 to i32
    %c0_i32_9 = arith.constant 0 : i32
    %22 = arith.cmpi ne, %21, %c0_i32_9 : i32
    scf.if %22 {
      %c0_10 = arith.constant 0 : index
      %c0_11 = arith.constant 0 : index
      %23 = vector.load %arg4[%c0_10, %c0_11] : memref<8x128xf32, #tpu.memory_space<vmem>>, vector<8x128xf32>
      %24 = vector.shape_cast %23 : vector<8x128xf32> to vector<1x8x128xf32>
      %cst_12 = arith.constant dense<0.000000e+00> : vector<1xf32>
      %25 = vector.multi_reduction <add>, %24, %cst_12 [1, 2] : vector<1x8x128xf32> to vector<1xf32>
      %26 = vector.shape_cast %25 : vector<1xf32> to vector<1x1x1xf32>
      %27 = vector.extract %26[0, 0, 0] : f32 from vector<1x1x1xf32>
      %cst_13 = arith.constant 9.99999974E-5 : f32
      %28 = arith.mulf %27, %cst_13 : f32
      %c0_14 = arith.constant 0 : index
      %c0_15 = arith.constant 0 : index
      %29 = memref.load %arg3[%c0_14, %c0_15] : memref<1x1xf32, #tpu.memory_space<smem>>
      memref.store %28, %arg3[%c0_14, %c0_15] : memref<1x1xf32, #tpu.memory_space<smem>>
    } else {
    }
    return
  }
  func.func @transform_0(%arg0: i32) -> (i32, i32) {
    %c0_i32 = arith.constant 0 : i32
    %c0_i32_0 = arith.constant 0 : i32
    return %arg0, %c0_i32 : i32, i32
  }
  func.func @transform_1(%arg0: i32) -> (i32, i32) {
    %c0_i32 = arith.constant 0 : i32
    %c0_i32_0 = arith.constant 0 : i32
    return %arg0, %c0_i32 : i32, i32
  }
  func.func @transform_2(%arg0: i32) -> (i32, i32) {
    %c0_i32 = arith.constant 0 : i32
    %c0_i32_0 = arith.constant 0 : i32
    %c0_i32_1 = arith.constant 0 : i32
    return %c0_i32, %c0_i32_0 : i32, i32
  }
}

</mosaic_0001>

<llo_original>
// kernel: tpu_custom_call.1
$region0: #{tpu_custom_call.1}
  #allocation0 [shape = 'u32[]', space=smem, size = 0x4, offset = 0x4, fixed_abs, tag = 'smem constant byte address 0x4 - core index']
  #allocation1 [shape = 'u32[144,128]{1,0:T(1,128)}', space=vmem, size = 0x12000, scoped, tag = 'internal scratch']
  #allocation2 [shape = 'f32[8,128]{1,0:T(8,128)}', space=vmem, size = 0x1000, scoped, tag = 'scratch operand']
  %s0 = inlined_call_operand.hbm [shape: f32[79,128], index: 0, kind: input, shape index: {}]
  %s1 = inlined_call_operand.hbm [shape: f32[79,128], index: 1, kind: input, shape index: {}]
  %s2 = inlined_call_operand.hbm [shape: f32[1,1], index: 2, kind: output, shape index: {}]
  %s3 = sld [smem:[#allocation0]]
  $region57: #{tpu_custom_call.1} parent=0
    _
  %s5 = ssub.s32 1, %s3
  %s6 = scalar_select 0, %s5, %s3
  $region1: #{tpu_custom_call.1} parent=0
    #allocation3 [shape = 'u8[65536]{0}', space=vmem, size = 0x10000, scoped, tag = 'input window, operand 0']
    #allocation4 [shape = 's32[2]{0}', space=sflag, size = 0x8, scoped, tag = 'scoped memory for tpu_custom_call.1']
    #allocation5 [shape = 's32[2]{0}', space=sflag, size = 0x8, scoped, tag = 'scoped memory for tpu_custom_call.1']
    #allocation6 [shape = 'u8[65536]{0}', space=vmem, size = 0x10000, scoped, tag = 'input window, operand 1']
    #allocation7 [shape = 's32[2]{0}', space=sflag, size = 0x8, scoped, tag = 'scoped memory for tpu_custom_call.1']
    #allocation8 [shape = 'u8[512]{0}', space=smem, size = 0x200, scoped, tag = 'output window, operand 0, single buffered']
    %7 = vsyncpa [#allocation4], 0
    %s8 = scalar_lea.sflag [#allocation4], 1
    %9 = vsyncpa %s8, 0
    %10 = vsyncpa [#allocation7], 0
    %s11 = scalar_lea.sflag [#allocation7], 1
    %12 = vsyncpa %s11, 0
    %13 = vsyncpa [#allocation5], 0
    loop: start=0, step=1, limit=4
    $region2: #{tpu_custom_call.1} parent=1 // loop_pre_header
      _
    $region3: #{tpu_custom_call.1} parent=1 // loop_header
      %s15 = sphi 0, %s19
      %p16 = scmp.ge.s32.totalorder %s15, 4
      %s25 = sphi 0, %s27
      %s28 = sphi 0, %s25
      %s29 = sphi 0, %s28
      %s45 = sphi 0, %s29
      %s51 = sphi 0, %s53
      %s54 = sphi 0, %s51
      %s55 = sphi 0, %s54
      %s71 = sphi 0, %s55
      %s75 = sphi 0, %s75
      %s77 = sphi 0, %s75
      %s78 = sphi 0, %s77
      %s92 = sphi 0, %s78
    $region4: #{tpu_custom_call.1} parent=1 // loop_header_branch
      %18 = sbr.rel (%p16) target = $region8
    $region5: #{tpu_custom_call.1} parent=1 // loop_body
      %s20 = ssub.s32 %s15, 1
      %s21 = ssub.s32 %s15, 2
      %s22 = sadd.s32 %s15, 1
      %s23 = ssub.s32 %s15, %s22
      %p24 = scmp.eq.s32.totalorder %s23, 0
      %s26 = sadd.s32 %s25, 1
      %s27 = scalar_select %p24, %s25, %s26
      %p30 = pneg %p24
      %p31 = scmp.eq.s32.totalorder %s15, 1
      %p32 = por %p30, %p31
      %p33 = scmp.ne.s32.totalorder %s25, %s28
      %p34 = scmp.eq.s32.totalorder %s15, 0
      %p35 = por %p33, %p34
      %p36 = scmp.ne.s32.totalorder %s25, %s28
      %p37 = scmp.eq.s32.totalorder %s20, 1
      %p38 = por %p36, %p37
      %p39 = scmp.ne.s32.totalorder %s28, %s29
      %p40 = scmp.eq.s32.totalorder %s20, 0
      %p41 = por %p39, %p40
      %p42 = scmp.ne.s32.totalorder %s28, %s29
      %p43 = scmp.eq.s32.totalorder %s21, 1
      %p44 = por %p42, %p43
      %p46 = scmp.ne.s32.totalorder %s29, %s45
      %p47 = scmp.eq.s32.totalorder %s21, 0
      %p48 = por %p46, %p47
      %s49 = ssub.s32 %s15, %s22
      %p50 = scmp.eq.s32.totalorder %s49, 0
      %s52 = sadd.s32 %s51, 1
      %s53 = scalar_select %p50, %s51, %s52
      %p56 = pneg %p50
      %p57 = scmp.eq.s32.totalorder %s15, 1
      %p58 = por %p56, %p57
      %p59 = scmp.ne.s32.totalorder %s51, %s54
      %p60 = scmp.eq.s32.totalorder %s15, 0
      %p61 = por %p59, %p60
      %p62 = scmp.ne.s32.totalorder %s51, %s54
      %p63 = scmp.eq.s32.totalorder %s20, 1
      %p64 = por %p62, %p63
      %p65 = scmp.ne.s32.totalorder %s54, %s55
      %p66 = scmp.eq.s32.totalorder %s20, 0
      %p67 = por %p65, %p66
      %p68 = scmp.ne.s32.totalorder %s54, %s55
      %p69 = scmp.eq.s32.totalorder %s21, 1
      %p70 = por %p68, %p69
      %p72 = scmp.ne.s32.totalorder %s55, %s71
      %p73 = scmp.eq.s32.totalorder %s21, 0
      %p74 = por %p72, %p73
      %s76 = sadd.s32 %s75, 1
      %p79 = scmp.eq.s32.totalorder %s15, 1
      %p80 = scmp.ne.s32.totalorder %s75, %s77
      %p81 = scmp.eq.s32.totalorder %s15, 0
      %p82 = por %p80, %p81
      %p83 = scmp.ne.s32.totalorder %s75, %s77
      %p84 = scmp.eq.s32.totalorder %s20, 1
      %p85 = por %p83, %p84
      %p86 = scmp.ne.s32.totalorder %s77, %s78
      %p87 = scmp.eq.s32.totalorder %s20, 0
      %p88 = por %p86, %p87
      %p89 = scmp.ne.s32.totalorder %s77, %s78
      %p90 = scmp.eq.s32.totalorder %s21, 1
      %p91 = por %p89, %p90
      %p93 = scmp.ne.s32.totalorder %s78, %s92
      %p94 = scmp.eq.s32.totalorder %s21, 0
      %p95 = por %p93, %p94
      %p96 = scmp.le.s32.totalorder 1, %s15
      %p97 = scmp.lt.s32.totalorder %s15, 3
      %p98 = pnand %p96, %p97
      %p99 = pneg %p98
      // Predicated region
      $region9: #{tpu_custom_call.1} parent=5 // pred_check
        _
      $region10: #{tpu_custom_call.1} parent=5 // pred_check_branch
        %101 = sbr.rel (%p98) target = $region12
      $region11: #{tpu_custom_call.1} parent=5 // pred_region
        %s102 = ssub.s32 %s15, 1
      $region12: #{tpu_custom_call.1} parent=5 // pred_fallthru
        _
      %p103 = scmp.lt.s32.totalorder %s15, 2
      // Predicated region
      $region13: #{tpu_custom_call.1} parent=5 // pred_check
        %p104 = pneg %p103
      $region14: #{tpu_custom_call.1} parent=5 // pred_check_branch
        %106 = sbr.rel (%p104) target = $region16
      $region15: #{tpu_custom_call.1} parent=5 // pred_region
        // Predicated region
        $region17: #{tpu_custom_call.1} parent=15 // pred_check
          %p107 = pneg %p35
        $region18: #{tpu_custom_call.1} parent=15 // pred_check_branch
          %109 = sbr.rel (%p107) target = $region20
        $region19: #{tpu_custom_call.1} parent=15 // pred_region
          %s110 = sand.u32 %s25, 1
          %s111 = scalar_lea.sflag [#allocation4], %s110
          %s112 = sand.u32 %s25, 1
          %s113 = smul.addr %s112, 64
          %s114 = scalar_lea.vmem [#allocation3], %s113
          %s115 = smul.u32 8, %s15
          %s116 = ssub.s32 10, %s115
          %p117 = scmp.lt.s32.totalorder %s116, 8
          %s118 = scalar_select %p117, %s116, 8
          %s119 = smul.u32 128, %s118
          %s121 = ssub.s32 1024, %s119
          %122 = vsyncadd %s111, %s121
          %p123 = scmp.ne.s32.totalorder 0, %s119
          %s124 = smul.addr %s115, 128
          %s125 = scalar_lea.hbm %s0, %s124
          %s126 = smul.u32 8, %s118
          %s127 = sshll.u32 %s114, 4
          %s128 = int_to_ptr.vmem [resolvable:$true] %s127
          %s129 = sshll.u32 %s126, 4
          %133 = dma.hbm_to_vmem [thread:$0]  (%p123), %s125, %s129, %s128, %s111, 128, 128, 8
        $region20: #{tpu_custom_call.1} parent=15 // pred_fallthru
          _
        // Predicated region
        $region21: #{tpu_custom_call.1} parent=15 // pred_check
          %p134 = pneg %p61
        $region22: #{tpu_custom_call.1} parent=15 // pred_check_branch
          %136 = sbr.rel (%p134) target = $region24
        $region23: #{tpu_custom_call.1} parent=15 // pred_region
          %s137 = sand.u32 %s51, 1
          %s138 = scalar_lea.sflag [#allocation7], %s137
          %s139 = sand.u32 %s51, 1
          %s140 = smul.addr %s139, 64
          %s141 = scalar_lea.vmem [#allocation6], %s140
          %s142 = smul.u32 8, %s15
          %s143 = ssub.s32 10, %s142
          %p144 = scmp.lt.s32.totalorder %s143, 8
          %s145 = scalar_select %p144, %s143, 8
          %s146 = smul.u32 128, %s145
          %s148 = ssub.s32 1024, %s146
          %149 = vsyncadd %s138, %s148
          %p150 = scmp.ne.s32.totalorder 0, %s146
          %s151 = smul.addr %s142, 128
          %s152 = scalar_lea.hbm %s1, %s151
          %s153 = smul.u32 8, %s145
          %s154 = sshll.u32 %s141, 4
          %s155 = int_to_ptr.vmem [resolvable:$true] %s154
          %s156 = sshll.u32 %s153, 4
          %160 = dma.hbm_to_vmem [thread:$0]  (%p150), %s152, %s156, %s155, %s138, 128, 128, 8
        $region24: #{tpu_custom_call.1} parent=15 // pred_fallthru
          _
      $region16: #{tpu_custom_call.1} parent=5 // pred_fallthru
        _
      %p161 = scmp.le.s32.totalorder 1, %s15
      %p162 = scmp.lt.s32.totalorder %s15, 3
      %p163 = pnand %p161, %p162
      %p164 = pneg %p163
      // Predicated region
      $region25: #{tpu_custom_call.1} parent=5 // pred_check
        _
      $region26: #{tpu_custom_call.1} parent=5 // pred_check_branch
        %166 = sbr.rel (%p163) target = $region28
      $region27: #{tpu_custom_call.1} parent=5 // pred_region
        %s167 = ssub.s32 %s15, 1
        %s168 = sand.u32 %s28, 1
        %s169 = scalar_lea.sflag [#allocation4], %s168
        %s170 = sand.u32 %s28, 1
        %s171 = smul.addr %s170, 64
        %s172 = scalar_lea.vmem [#allocation3], %s171
        // Predicated region
        $region29: #{tpu_custom_call.1} parent=27 // pred_check
          %p173 = pneg %p41
        $region30: #{tpu_custom_call.1} parent=27 // pred_check_branch
          %175 = sbr.rel (%p173) target = $region32
        $region31: #{tpu_custom_call.1} parent=27 // pred_region
          %176 = dma.done %s169, 1024
        $region32: #{tpu_custom_call.1} parent=27 // pred_fallthru
          _
        %s177 = sand.u32 %s54, 1
        %s178 = scalar_lea.sflag [#allocation7], %s177
        %s179 = sand.u32 %s54, 1
        %s180 = smul.addr %s179, 64
        %s181 = scalar_lea.vmem [#allocation6], %s180
        // Predicated region
        $region33: #{tpu_custom_call.1} parent=27 // pred_check
          %p182 = pneg %p67
        $region34: #{tpu_custom_call.1} parent=27 // pred_check_branch
          %184 = sbr.rel (%p182) target = $region36
        $region35: #{tpu_custom_call.1} parent=27 // pred_region
          %185 = dma.done %s178, 1024
        $region36: #{tpu_custom_call.1} parent=27 // pred_fallthru
          _
        %s186 = sand.u32 %s28, 1
        %s187 = scalar_lea.sflag [#allocation4], %s186
        %s188 = sand.u32 %s28, 1
        %s189 = smul.addr %s188, 64
        %s190 = scalar_lea.vmem [#allocation3], %s189
        %p191 = pneg %p41
        %p192 = pneg %p38
        %s193 = sand.u32 %s54, 1
        %s194 = scalar_lea.sflag [#allocation7], %s193
        %s195 = sand.u32 %s54, 1
        %s196 = smul.addr %s195, 64
        %s197 = scalar_lea.vmem [#allocation6], %s196
        %p198 = pneg %p67
        %p199 = pneg %p64
        %p200 = pneg %p88
        %p201 = pneg %p85
        %s202 = smul.u32 8, %s20
        %s203 = ssub.s32 10, %s202
        %p204 = scmp.lt.s32.totalorder %s203, 8
        %s205 = scalar_select %p204, %s203, 8
        %s206 = smul.u32 128, %s205
        %s207 = smul.u32 8, %s20
        %s208 = ssub.s32 10, %s207
        %p209 = scmp.lt.s32.totalorder %s208, 8
        %s210 = scalar_select %p209, %s208, 8
        %s211 = smul.u32 128, %s210
        %p212 = scmp.eq.s32.totalorder %s20, 0
        // Predicated region
        $region37: #{tpu_custom_call.1} parent=27 // pred_check
          %p213 = pneg %p212
        $region38: #{tpu_custom_call.1} parent=27 // pred_check_branch
          %215 = sbr.rel (%p213) target = $region40
        $region39: #{tpu_custom_call.1} parent=27 // pred_region
          %216 = vst [vmem:[#allocation2] sm:$0xff] 0.0
        $region40: #{tpu_custom_call.1} parent=27 // pred_fallthru
          _
        %v217 = vld [vmem:[%s172] sm:$0xff]
        %v218 = vld [vmem:[%s172 + $0x8] sm:$0xff]
        %v219 = vld [vmem:[%s172 + $0x10] sm:$0xff]
        %v220 = vld [vmem:[%s172 + $0x18] sm:$0xff]
        %v221 = vld [vmem:[%s172 + $0x20] sm:$0xff]
        %v222 = vld [vmem:[%s172 + $0x28] sm:$0xff]
        %v223 = vld [vmem:[%s172 + $0x30] sm:$0xff]
        %v224 = vld [vmem:[%s172 + $0x38] sm:$0xff]
        %v225 = vld [vmem:[%s181] sm:$0xff]
        %v226 = vld [vmem:[%s181 + $0x8] sm:$0xff]
        %v227 = vld [vmem:[%s181 + $0x10] sm:$0xff]
        %v228 = vld [vmem:[%s181 + $0x18] sm:$0xff]
        %v229 = vld [vmem:[%s181 + $0x20] sm:$0xff]
        %v230 = vld [vmem:[%s181 + $0x28] sm:$0xff]
        %v231 = vld [vmem:[%s181 + $0x30] sm:$0xff]
        %v232 = vld [vmem:[%s181 + $0x38] sm:$0xff]
        %v233 = vsub.f32 %v217, %v225
        %v234 = vsub.f32 %v218, %v226
        %v235 = vsub.f32 %v219, %v227
        %v236 = vsub.f32 %v220, %v228
        %v237 = vsub.f32 %v221, %v229
        %v238 = vsub.f32 %v222, %v230
        %v239 = vsub.f32 %v223, %v231
        %v240 = vsub.f32 %v224, %v232
        %v241 = vmul.f32 %v233, %v233
        %v242 = vmul.f32 %v234, %v234
        %v243 = vmul.f32 %v235, %v235
        %v244 = vmul.f32 %v236, %v236
        %v245 = vmul.f32 %v237, %v237
        %v246 = vmul.f32 %v238, %v238
        %v247 = vmul.f32 %v239, %v239
        %v248 = vmul.f32 %v240, %v240
        %v249 = vlaneseq
        %v250 = vshrl.u32 %v249, 7
        %v251 = vadd.s32 %v250, 8
        %v252 = vadd.s32 %v250, 16
        %v253 = vadd.s32 %v250, 24
        %v254 = vadd.s32 %v250, 32
        %v255 = vadd.s32 %v250, 40
        %v256 = vadd.s32 %v250, 48
        %v257 = vadd.s32 %v250, 56
        %s258 = smul.u32 %s20, 64
        %v259 = vstv %s258
        %v260 = vadd.s32 %v250, %v259
        %v261 = vadd.s32 %v251, %v259
        %v262 = vadd.s32 %v252, %v259
        %v263 = vadd.s32 %v253, %v259
        %v264 = vadd.s32 %v254, %v259
        %v265 = vadd.s32 %v255, %v259
        %v266 = vadd.s32 %v256, %v259
        %v267 = vadd.s32 %v257, %v259
        %vm268 = vcmp.lt.s32.totalorder %v260, 79
        %vm269 = vcmp.lt.s32.totalorder %v261, 79
        %vm270 = vcmp.lt.s32.totalorder %v262, 79
        %vm271 = vcmp.lt.s32.totalorder %v263, 79
        %vm272 = vcmp.lt.s32.totalorder %v264, 79
        %vm273 = vcmp.lt.s32.totalorder %v265, 79
        %vm274 = vcmp.lt.s32.totalorder %v266, 79
        %vm275 = vcmp.lt.s32.totalorder %v267, 79
        %v276 = vsel %vm268, %v241, 0.0
        %v277 = vsel %vm269, %v242, 0.0
        %v278 = vsel %vm270, %v243, 0.0
        %v279 = vsel %vm271, %v244, 0.0
        %v280 = vsel %vm272, %v245, 0.0
        %v281 = vsel %vm273, %v246, 0.0
        %v282 = vsel %vm274, %v247, 0.0
        %v283 = vsel %vm275, %v248, 0.0
        %v284 = vld [vmem:[#allocation2] sm:$0xff]
        %v285 = vadd.f32 %v276, %v277
        %v286 = vadd.f32 %v285, %v278
        %v287 = vadd.f32 %v286, %v279
        %v288 = vadd.f32 %v287, %v280
        %v289 = vadd.f32 %v288, %v281
        %v290 = vadd.f32 %v289, %v282
        %v291 = vadd.f32 %v290, %v283
        %v292 = vadd.f32 %v284, %v291
        %293 = vst [vmem:[#allocation2] sm:$0xff] %v292
        %p294 = scmp.eq.s32.totalorder %s20, 1
        // Predicated region
        $region41: #{tpu_custom_call.1} parent=27 // pred_check
          %p295 = pneg %p294
        $region42: #{tpu_custom_call.1} parent=27 // pred_check_branch
          %297 = sbr.rel (%p295) target = $region44
        $region43: #{tpu_custom_call.1} parent=27 // pred_region
          %v298 = vld [vmem:[#allocation2] sm:$0xff]
          %299 = vadd.xlane.f32.xlu0 %v298
          %v300 = vpop.xlane.xlu0 %299
          %v301 = vrot.slane %v300, 4
          %v302 = vadd.f32 %v300, %v301
          %v303 = vrot.slane %v302, 2
          %v304 = vadd.f32 %v302, %v303
          %v305 = vrot.slane %v304, 1
          %v306 = vadd.f32 %v304, %v305
          %s307 = vtos %v306
          %s308 = smul.f32 %s307, 0.0001
          %s309 = scalar_lea.smem [#allocation8], 0
          %310 = sst [smem:[%s309]] %s308
        $region44: #{tpu_custom_call.1} parent=27 // pred_fallthru
          _
        // Predicated region
        $region45: #{tpu_custom_call.1} parent=27 // pred_check
          %p311 = pneg %p85
        $region46: #{tpu_custom_call.1} parent=27 // pred_check_branch
          %313 = sbr.rel (%p311) target = $region48
        $region47: #{tpu_custom_call.1} parent=27 // pred_region
          %s315 = ssub.s32 16, 16
          %316 = vsyncadd [#allocation5], %s315
          %319 = dma.smem_to_hbm [#allocation8], 16, %s2, [#allocation5]
        $region48: #{tpu_custom_call.1} parent=27 // pred_fallthru
          _
        // Predicated region
        $region49: #{tpu_custom_call.1} parent=27 // pred_check
          %p320 = pneg %p85
        $region50: #{tpu_custom_call.1} parent=27 // pred_check_branch
          %322 = sbr.rel (%p320) target = $region52
        $region51: #{tpu_custom_call.1} parent=27 // pred_region
          %323 = dma.done [#allocation5], 16
        $region52: #{tpu_custom_call.1} parent=27 // pred_fallthru
          _
        %324 = sfence
      $region28: #{tpu_custom_call.1} parent=5 // pred_fallthru
        _
      %p325 = scmp.le.s32.totalorder 2, %s15
      // Predicated region
      $region53: #{tpu_custom_call.1} parent=5 // pred_check
        %p326 = pneg %p325
      $region54: #{tpu_custom_call.1} parent=5 // pred_check_branch
        %328 = sbr.rel (%p326) target = $region56
      $region55: #{tpu_custom_call.1} parent=5 // pred_region
        %s329 = ssub.s32 %s15, 2
      $region56: #{tpu_custom_call.1} parent=5 // pred_fallthru
        _
    $region6: #{tpu_custom_call.1} parent=1 // loop_footer
      %s19 = sadd.s32 1, %s15
    $region7: #{tpu_custom_call.1} parent=1 // loop_footer_branch
      %14 = sbr.rel target = $region3
    $region8: #{tpu_custom_call.1} parent=1 // loop_exit
      _
    %330 = vsyncpa [#allocation4], 1
    %s331 = scalar_lea.sflag [#allocation4], 1
    %332 = vsyncpa %s331, 1
    %333 = vsyncpa [#allocation7], 1
    %s334 = scalar_lea.sflag [#allocation7], 1
    %335 = vsyncpa %s334, 1
    %336 = vsyncpa [#allocation5], 1
    %s337 = scalar_lea.sflag [#allocation5], 1
    %338 = vsyncpa %s337, 1

</llo_original>
